<compile_context>
chip_gen: v5e
topology: v5e:2x2
jax: 0.10.0
libtpu: 0.0.40
codegen_flags: <defaults>
</compile_context>

<pallas_src>
import jax
import jax.numpy as jnp
from jax.experimental import pallas as pl
from jax.experimental.pallas import tpu as pltpu

_LANE = 128


def _relu_kernel(x_ref, o_ref):
    # ReLU(x) = max(0, x): single VPU vmax (vs. compare+select for where).
    o_ref[...] = jnp.maximum(x_ref[...], 0)


def _min_sublane(dtype) -> int:
    # Sub-32-bit dtypes pack along sublanes; keep row tiles a multiple of the
    # packed (sublane, 128) vreg tile so vld/vst stay unmasked.
    itemsize = jnp.dtype(dtype).itemsize
    return max(8, 32 // max(itemsize, 1))


def custom_relu(x: jax.Array) -> jax.Array:
    orig_shape = x.shape
    dtype = x.dtype
    n = x.size
    if n == 0:
        return x

    itemsize = jnp.dtype(dtype).itemsize

    flat = x.reshape(-1)
    pad = (-n) % _LANE
    if pad:
        # Rare fallback for sizes not divisible by the 128-lane width.
        # The common case (numel % 128 == 0) takes the copy-free path.
        flat = jnp.pad(flat, (0, pad))
    rows = flat.shape[0] // _LANE
    x2d = flat.reshape(rows, _LANE)

    # ~1 MiB blocks: big enough to sit on the ~85%-of-roofline plateau
    # (>=512 f32 rows), small enough that in+out double-buffered (~4 MiB)
    # fits every generation's default scoped VMEM.
    tile_rows = max(_min_sublane(dtype), (1 << 20) // (_LANE * itemsize))

    if rows <= tile_rows:
        # Tiny input: one full-array block (exempt from the (8,128) divisibility
        # rule), no grid, no per-step pipeline bookkeeping.
        out2d = pl.pallas_call(
            _relu_kernel,
            out_shape=jax.ShapeDtypeStruct((rows, _LANE), dtype),
        )(x2d)
    else:
        grid = (pl.cdiv(rows, tile_rows),)
        out2d = pl.pallas_call(
            _relu_kernel,
            out_shape=jax.ShapeDtypeStruct((rows, _LANE), dtype),
            grid=grid,
            in_specs=[pl.BlockSpec((tile_rows, _LANE), lambda i: (i, 0))],
            out_specs=pl.BlockSpec((tile_rows, _LANE), lambda i: (i, 0)),
            compiler_params=pltpu.CompilerParams(
                dimension_semantics=("parallel",)
            ),
        )(x2d)

    out_flat = out2d.reshape(-1)
    if pad:
        out_flat = out_flat[:n]
    return out_flat.reshape(orig_shape)


if __name__ == "__main__":
    key = jax.random.PRNGKey(0)

    # Primary shape implied by the module's CNN usage: NCHW [2, 4, 16, 16].
    x = jax.random.normal(key, (2, 4, 16, 16), dtype=jnp.float32)
    out = custom_relu(x)
    jax.block_until_ready(out)

    ref = jnp.where(x < 0, 0.0, x)  # matches z = x.clone(); z[x < 0] = 0
    assert out.shape == x.shape
    assert out.dtype == x.dtype
    assert jnp.allclose(out, ref), "mismatch vs reference ReLU (NCHW)"

    # Tiny non-128-multiple input (docstring example shape) exercises the
    # padding fallback path.
    x2 = jax.random.normal(jax.random.PRNGKey(1), (2,), dtype=jnp.float32)
    out2 = custom_relu(x2)
    jax.block_until_ready(out2)
    assert jnp.allclose(out2, jnp.where(x2 < 0, 0.0, x2)), "mismatch (1D)"

    print("KERNEL_OK")
</pallas_src>

<mosaic_0001>
module attributes {stable_mosaic.version = 11 : i64} {
  func.func @_relu_kernel(%arg0: memref<16x128xf32, #tpu.memory_space<vmem>>, %arg1: memref<16x128xf32, #tpu.memory_space<vmem>>) attributes {dimension_semantics = [], scalar_prefetch = 0 : i64, scratch_operands = 0 : i64, tpu.core_type = #tpu.core_type<tc>} {
    %c0 = arith.constant 0 : index
    %c0_0 = arith.constant 0 : index
    %0 = vector.load %arg0[%c0, %c0_0] : memref<16x128xf32, #tpu.memory_space<vmem>>, vector<16x128xf32>
    %cst = arith.constant 0.000000e+00 : f32
    %1 = vector.broadcast %cst : f32 to vector<16x128xf32>
    %2 = arith.maximumf %0, %1 : vector<16x128xf32>
    %c0_1 = arith.constant 0 : index
    %c0_2 = arith.constant 0 : index
    %3 = vector.load %arg1[%c0_1, %c0_2] : memref<16x128xf32, #tpu.memory_space<vmem>>, vector<16x128xf32>
    tpu.vector_store %arg1[%c0_1, %c0_2], %2 {strides = array<i32>} : memref<16x128xf32, #tpu.memory_space<vmem>>, vector<16x128xf32>,
    return
  }
}

</mosaic_0001>

<llo_original>
// kernel: tpu_custom_call.1
$region0: #{tpu_custom_call.1}
  #allocation0 [shape = 'u32[]', space=smem, size = 0x4, offset = 0x4, fixed_abs, tag = 'smem constant byte address 0x4 - core index']
  #allocation1 [shape = 'u32[72,128]{1,0:T(1,128)}', space=vmem, size = 0x9000, scoped, tag = 'internal scratch']
  %s0 = inlined_call_operand.hbm [shape: f32[16,128], index: 0, kind: input, shape index: {}]
  %s1 = inlined_call_operand.hbm [shape: f32[16,128], index: 1, kind: output, shape index: {}]
  %s2 = sld [smem:[#allocation0]]
  $region18: #{tpu_custom_call.1} parent=0
    _
  %s4 = ssub.s32 1, %s2
  %s5 = scalar_select 0, %s4, %s2
  $region1: #{tpu_custom_call.1} parent=0
    #allocation2 [shape = 'u8[8192]{0}', space=vmem, size = 0x2000, scoped, tag = 'input window, operand 0, single buffered']
    #allocation3 [shape = 's32[1]{0}', space=sflag, size = 0x4, scoped, tag = 'scoped memory for tpu_custom_call.1']
    #allocation4 [shape = 's32[1]{0}', space=sflag, size = 0x4, scoped, tag = 'scoped memory for tpu_custom_call.1']
    #allocation5 [shape = 'u8[8192]{0}', space=vmem, size = 0x2000, scoped, tag = 'output window, operand 0, single buffered']
    %6 = vsyncpa [#allocation3], 0
    %7 = vsyncpa [#allocation4], 0
    // Predicated region
    $region2: #{tpu_custom_call.1} parent=1 // pred_check
      _
    $region3: #{tpu_custom_call.1} parent=1 // pred_check_branch
      %9 = sbr.rel (0) target = $region5
    $region4: #{tpu_custom_call.1} parent=1 // pred_region
      %11 = vsyncadd [#allocation3], 0
      %s12 = sshll.u32 %s0, 4
      %s13 = int_to_ptr.hbm [resolvable:$true] %s12
      %s14 = sshll.u32 [#allocation2], 4
      %s15 = int_to_ptr.vmem [resolvable:$true] %s14
      %20 = dma.hbm_to_vmem [thread:$0]  %s13, 256, %s15, [#allocation3], 128, 128, 8
    $region5: #{tpu_custom_call.1} parent=1 // pred_fallthru
      _
    // Predicated region
    $region6: #{tpu_custom_call.1} parent=1 // pred_check
      _
    $region7: #{tpu_custom_call.1} parent=1 // pred_check_branch
      %22 = sbr.rel (0) target = $region9
    $region8: #{tpu_custom_call.1} parent=1 // pred_region
      %24 = dma.done [#allocation3], 256
    $region9: #{tpu_custom_call.1} parent=1 // pred_fallthru
      _
    %v25 = vld [vmem:[#allocation2] sm:$0xff]
    %v26 = vld [vmem:[#allocation2 + $0x8] sm:$0xff]
    %v27 = vmax.f32 %v25, 0.0
    %v28 = vmax.f32 %v26, 0.0
    %29 = vst [vmem:[#allocation5] sm:$0xff] %v27
    %30 = vst [vmem:[#allocation5 + $0x8] sm:$0xff] %v28
    // Predicated region
    $region10: #{tpu_custom_call.1} parent=1 // pred_check
      _
    $region11: #{tpu_custom_call.1} parent=1 // pred_check_branch
      %32 = sbr.rel (0) target = $region13
    $region12: #{tpu_custom_call.1} parent=1 // pred_region
      %34 = vsyncadd [#allocation4], 0
      %s35 = sshll.u32 [#allocation5], 4
      %s36 = int_to_ptr.vmem [resolvable:$true] %s35
      %s37 = sshll.u32 %s1, 4
      %s38 = int_to_ptr.hbm [resolvable:$true] %s37
      %43 = dma.vmem_to_hbm [thread:$0]  %s36, 256, %s38, [#allocation4], 128, 128, 8
    $region13: #{tpu_custom_call.1} parent=1 // pred_fallthru
      _
    // Predicated region
    $region14: #{tpu_custom_call.1} parent=1 // pred_check
      _
    $region15: #{tpu_custom_call.1} parent=1 // pred_check_branch
      %45 = sbr.rel (0) target = $region17
    $region16: #{tpu_custom_call.1} parent=1 // pred_region
      %47 = dma.done [#allocation4], 256
    $region17: #{tpu_custom_call.1} parent=1 // pred_fallthru
      _
    %48 = vsyncpa [#allocation3], 1
    %49 = vsyncpa [#allocation4], 1

</llo_original>
